<compile_context>
chip_gen: v6e
topology: v6e:2x2x1
jax: 0.10.0
libtpu: 0.0.40
codegen_flags: <defaults>
</compile_context>

<pallas_src>
import functools

import jax
import jax.numpy as jnp
from jax import lax
from jax.experimental import pallas as pl
from jax.experimental.pallas import tpu as pltpu


def _diff_loss_kernel(si_ref, ro_ref, out_ref, *, n_attributes, n_values):
    # si_ref / ro_ref: (A*V, TB) blocks (values/attributes on sublanes, batch on
    # lanes).  out_ref: (A+2, TB) packed [acc_or rows, loss row, acc row].
    A, V = n_attributes, n_values
    si = si_ref[...].astype(jnp.float32)
    ro = ro_ref[...].astype(jnp.float32)
    tb = si.shape[1]

    # value-position iota, shared by every attribute (hoisted out of the loop)
    pos = lax.broadcasted_iota(jnp.int32, (V, tb), 0)
    row_id = lax.broadcasted_iota(jnp.int32, (A + 2, tb), 0)

    loss_sum = jnp.zeros((1, tb), jnp.float32)
    n_match = jnp.zeros((1, tb), jnp.float32)
    packed = jnp.zeros((A + 2, tb), jnp.float32)

    # A is a small static int -> unrolled loop of sublane reductions.  Each
    # reduce covers a full 128-lane batch group, so XLU load per row is tiny.
    for a in range(A):
        lo = a * V
        sro = ro[lo:lo + V, :]        # (V, TB) logits of this attribute
        ssi = si[lo:lo + V, :]        # (V, TB) sender one-hot-ish scores

        ro_max = jnp.max(sro, axis=0, keepdims=True)     # (1, TB) reused for
        si_max = jnp.max(ssi, axis=0, keepdims=True)     # argmax AND logsumexp

        # first-occurrence argmax (matches jnp/torch argmax tie-breaking)
        ro_arg = jnp.min(jnp.where(sro == ro_max, pos, V), axis=0, keepdims=True)
        si_arg = jnp.min(jnp.where(ssi == si_max, pos, V), axis=0, keepdims=True)

        match = (ro_arg == si_arg).astype(jnp.float32)   # (1, TB)
        n_match = n_match + match
        packed = packed + jnp.where(row_id == a, match, 0.0)   # acc_or row a

        # cross entropy with label = si_arg: logsumexp(ro_seg) - ro_seg[label]
        picked = jnp.sum(jnp.where(pos == si_arg, sro, 0.0), axis=0, keepdims=True)
        sum_e = jnp.sum(jnp.exp(sro - ro_max), axis=0, keepdims=True)
        loss_sum = loss_sum + (jnp.log(sum_e) + ro_max - picked)

    loss = loss_sum * (1.0 / A)
    acc = (n_match == A).astype(jnp.float32)

    packed = packed + jnp.where(row_id == A, loss, 0.0)
    packed = packed + jnp.where(row_id == A + 1, acc, 0.0)
    out_ref[...] = packed.astype(out_ref.dtype)          # single packed store


@functools.partial(jax.jit, static_argnums=(2, 3))
def diff_loss(sender_input, receiver_output, n_attributes, n_values):
    """sender_input / receiver_output: (B, n_attributes * n_values) float."""
    A, V = n_attributes, n_values
    S = A * V
    B = sender_input.shape[0]

    # Transposed layout: values/attributes -> sublanes, batch -> lanes.
    si_t = sender_input.reshape(B, S).T      # (S, B)
    ro_t = receiver_output.reshape(B, S).T   # (S, B)

    # Lane (batch) tile: multiple of 128, capped at 512.  Pad batch so the grid
    # always covers it exactly (no grid=1 / oversized-block fallback).
    tb = min(512, pl.cdiv(B, 128) * 128)
    b_pad = pl.cdiv(B, tb) * tb
    if b_pad != B:
        si_t = jnp.pad(si_t, ((0, 0), (0, b_pad - B)))
        ro_t = jnp.pad(ro_t, ((0, 0), (0, b_pad - B)))
    grid = (b_pad // tb,)

    out_w = A + 2
    kernel = functools.partial(_diff_loss_kernel, n_attributes=A, n_values=V)

    packed = pl.pallas_call(
        kernel,
        out_shape=jax.ShapeDtypeStruct((out_w, b_pad), jnp.float32),
        grid_spec=pltpu.PrefetchScalarGridSpec(
            num_scalar_prefetch=0,
            grid=grid,
            in_specs=[
                pl.BlockSpec((S, tb), lambda i: (0, i)),
                pl.BlockSpec((S, tb), lambda i: (0, i)),
            ],
            out_specs=pl.BlockSpec((out_w, tb), lambda i: (0, i)),
        ),
        compiler_params=pltpu.CompilerParams(
            dimension_semantics=("parallel",),
        ),
    )(si_t, ro_t)

    acc_or = packed[:A, :B].T        # (B, A)
    loss = packed[A, :B]             # (B,)
    acc = packed[A + 1, :B]          # (B,)
    return loss, {"acc": acc, "acc_or": acc_or}


def _reference(sender_input, receiver_output, n_attributes, n_values):
    B = sender_input.shape[0]
    si = sender_input.reshape(B, n_attributes, n_values).astype(jnp.float32)
    ro = receiver_output.reshape(B, n_attributes, n_values).astype(jnp.float32)
    si_arg = jnp.argmax(si, axis=-1)
    ro_arg = jnp.argmax(ro, axis=-1)
    acc_or = (si_arg == ro_arg).astype(jnp.float32)
    acc = (jnp.sum(si_arg == ro_arg, axis=-1) == n_attributes).astype(jnp.float32)
    logp = jax.nn.log_softmax(ro, axis=-1)
    ce = -jnp.take_along_axis(logp, si_arg[..., None], axis=-1)[..., 0]
    loss = jnp.mean(ce, axis=-1)
    return loss, acc, acc_or


if __name__ == "__main__":
    key = jax.random.PRNGKey(0)
    B, A, V = 8, 4, 8  # batch, n_attributes, n_values

    k1, k2 = jax.random.split(key)
    # sender_input: one-hot per attribute (as in the EGG dataset)
    labels = jax.random.randint(k1, (B, A), 0, V)
    sender_input = jax.nn.one_hot(labels, V, dtype=jnp.float32).reshape(B, A * V)
    # receiver_output: arbitrary logits
    receiver_output = jax.random.normal(k2, (B, A * V), dtype=jnp.float32)

    loss, aux = diff_loss(sender_input, receiver_output, A, V)
    jax.block_until_ready((loss, aux["acc"], aux["acc_or"]))

    ref_loss, ref_acc, ref_acc_or = _reference(sender_input, receiver_output, A, V)
    assert jnp.allclose(loss, ref_loss, atol=1e-5, rtol=1e-5), (loss, ref_loss)
    assert jnp.allclose(aux["acc"], ref_acc), (aux["acc"], ref_acc)
    assert jnp.allclose(aux["acc_or"], ref_acc_or), (aux["acc_or"], ref_acc_or)

    print("KERNEL_OK")
</pallas_src>

<mosaic_0001>
module attributes {stable_mosaic.version = 11 : i64} {
  func.func @_diff_loss_kernel(%arg0: i32, %arg1: memref<32x128xf32, #tpu.memory_space<vmem>>, %arg2: memref<32x128xf32, #tpu.memory_space<vmem>>, %arg3: memref<6x128xf32, #tpu.memory_space<vmem>>) attributes {dimension_semantics = [#tpu.dimension_semantics<parallel>], iteration_bounds = array<i64: 1>, scalar_prefetch = 0 : i64, scratch_operands = 0 : i64, tpu.core_type = #tpu.core_type<tc>, window_params = [{transform_indices = @transform_0, window_bounds = array<i64: 32, 128>}, {transform_indices = @transform_1, window_bounds = array<i64: 32, 128>}, {transform_indices = @transform_2, window_bounds = array<i64: 6, 128>}]} {
    %c0 = arith.constant 0 : index
    %c0_0 = arith.constant 0 : index
    %0 = vector.load %arg1[%c0, %c0_0] : memref<32x128xf32, #tpu.memory_space<vmem>>, vector<32x128xf32>
    %c0_1 = arith.constant 0 : index
    %c0_2 = arith.constant 0 : index
    %1 = vector.load %arg2[%c0_1, %c0_2] : memref<32x128xf32, #tpu.memory_space<vmem>>, vector<32x128xf32>
    %2 = tpu.iota {dimensions = array<i32: 0>} : vector<8x128xi32>
    %3 = tpu.iota {dimensions = array<i32: 0>} : vector<6x128xi32>
    %cst = arith.constant 0.000000e+00 : f32
    %4 = vector.broadcast %cst : f32 to vector<1x128xf32>
    %cst_3 = arith.constant 0.000000e+00 : f32
    %5 = vector.broadcast %cst_3 : f32 to vector<1x128xf32>
    %cst_4 = arith.constant 0.000000e+00 : f32
    %6 = vector.broadcast %cst_4 : f32 to vector<6x128xf32>
    %7 = vector.extract_strided_slice %1 {offsets = [0, 0], sizes = [8, 128], strides = [1, 1]} : vector<32x128xf32> to vector<8x128xf32>
    %8 = vector.extract_strided_slice %0 {offsets = [0, 0], sizes = [8, 128], strides = [1, 1]} : vector<32x128xf32> to vector<8x128xf32>
    %cst_5 = arith.constant dense<0xFF800000> : vector<128xf32>
    %9 = vector.multi_reduction <maximumf>, %7, %cst_5 [0] : vector<8x128xf32> to vector<128xf32>
    %10 = vector.shape_cast %9 : vector<128xf32> to vector<1x128xf32>
    %cst_6 = arith.constant dense<0xFF800000> : vector<128xf32>
    %11 = vector.multi_reduction <maximumf>, %8, %cst_6 [0] : vector<8x128xf32> to vector<128xf32>
    %12 = vector.shape_cast %11 : vector<128xf32> to vector<1x128xf32>
    %13 = vector.broadcast %10 : vector<1x128xf32> to vector<8x128xf32>
    %14 = arith.cmpf oeq, %7, %13 : vector<8x128xf32>
    %c8_i32 = arith.constant 8 : i32
    %15 = vector.broadcast %c8_i32 : i32 to vector<8x128xi32>
    %16 = arith.select %14, %2, %15 : vector<8x128xi1>, vector<8x128xi32>
    %cst_7 = arith.constant dense<2147483647> : vector<128xi32>
    %17 = vector.multi_reduction <minsi>, %16, %cst_7 [0] : vector<8x128xi32> to vector<128xi32>
    %18 = vector.shape_cast %17 : vector<128xi32> to vector<1x128xi32>
    %19 = vector.broadcast %12 : vector<1x128xf32> to vector<8x128xf32>
    %20 = arith.cmpf oeq, %8, %19 : vector<8x128xf32>
    %c8_i32_8 = arith.constant 8 : i32
    %21 = vector.broadcast %c8_i32_8 : i32 to vector<8x128xi32>
    %22 = arith.select %20, %2, %21 : vector<8x128xi1>, vector<8x128xi32>
    %cst_9 = arith.constant dense<2147483647> : vector<128xi32>
    %23 = vector.multi_reduction <minsi>, %22, %cst_9 [0] : vector<8x128xi32> to vector<128xi32>
    %24 = vector.shape_cast %23 : vector<128xi32> to vector<1x128xi32>
    %25 = arith.cmpi eq, %18, %24 : vector<1x128xi32>
    %26 = arith.extui %25 : vector<1x128xi1> to vector<1x128xi32>
    %27 = arith.sitofp %26 : vector<1x128xi32> to vector<1x128xf32>
    %28 = arith.addf %5, %27 : vector<1x128xf32>
    %c0_i32 = arith.constant 0 : i32
    %29 = vector.broadcast %c0_i32 : i32 to vector<6x128xi32>
    %30 = arith.cmpi eq, %3, %29 : vector<6x128xi32>
    %cst_10 = arith.constant 0.000000e+00 : f32
    %31 = vector.shape_cast %27 : vector<1x128xf32> to vector<1x128xf32>
    %32 = vector.broadcast %31 : vector<1x128xf32> to vector<6x128xf32>
    %33 = vector.broadcast %cst_10 : f32 to vector<6x128xf32>
    %34 = arith.select %30, %32, %33 : vector<6x128xi1>, vector<6x128xf32>
    %35 = arith.addf %6, %34 : vector<6x128xf32>
    %36 = vector.broadcast %24 : vector<1x128xi32> to vector<8x128xi32>
    %37 = arith.cmpi eq, %2, %36 : vector<8x128xi32>
    %cst_11 = arith.constant 0.000000e+00 : f32
    %38 = vector.broadcast %cst_11 : f32 to vector<8x128xf32>
    %39 = arith.select %37, %7, %38 : vector<8x128xi1>, vector<8x128xf32>
    %cst_12 = arith.constant dense<0.000000e+00> : vector<128xf32>
    %40 = vector.multi_reduction <add>, %39, %cst_12 [0] : vector<8x128xf32> to vector<128xf32>
    %41 = vector.shape_cast %40 : vector<128xf32> to vector<1x128xf32>
    %42 = vector.broadcast %10 : vector<1x128xf32> to vector<8x128xf32>
    %43 = arith.subf %7, %42 : vector<8x128xf32>
    %44 = math.exp %43 : vector<8x128xf32>
    %cst_13 = arith.constant dense<0.000000e+00> : vector<128xf32>
    %45 = vector.multi_reduction <add>, %44, %cst_13 [0] : vector<8x128xf32> to vector<128xf32>
    %46 = vector.shape_cast %45 : vector<128xf32> to vector<1x128xf32>
    %47 = math.log %46 : vector<1x128xf32>
    %48 = arith.addf %47, %10 : vector<1x128xf32>
    %49 = arith.subf %48, %41 : vector<1x128xf32>
    %50 = arith.addf %4, %49 : vector<1x128xf32>
    %51 = vector.extract_strided_slice %1 {offsets = [8, 0], sizes = [8, 128], strides = [1, 1]} : vector<32x128xf32> to vector<8x128xf32>
    %52 = vector.extract_strided_slice %0 {offsets = [8, 0], sizes = [8, 128], strides = [1, 1]} : vector<32x128xf32> to vector<8x128xf32>
    %cst_14 = arith.constant dense<0xFF800000> : vector<128xf32>
    %53 = vector.multi_reduction <maximumf>, %51, %cst_14 [0] : vector<8x128xf32> to vector<128xf32>
    %54 = vector.shape_cast %53 : vector<128xf32> to vector<1x128xf32>
    %cst_15 = arith.constant dense<0xFF800000> : vector<128xf32>
    %55 = vector.multi_reduction <maximumf>, %52, %cst_15 [0] : vector<8x128xf32> to vector<128xf32>
    %56 = vector.shape_cast %55 : vector<128xf32> to vector<1x128xf32>
    %57 = vector.broadcast %54 : vector<1x128xf32> to vector<8x128xf32>
    %58 = arith.cmpf oeq, %51, %57 : vector<8x128xf32>
    %c8_i32_16 = arith.constant 8 : i32
    %59 = vector.broadcast %c8_i32_16 : i32 to vector<8x128xi32>
    %60 = arith.select %58, %2, %59 : vector<8x128xi1>, vector<8x128xi32>
    %cst_17 = arith.constant dense<2147483647> : vector<128xi32>
    %61 = vector.multi_reduction <minsi>, %60, %cst_17 [0] : vector<8x128xi32> to vector<128xi32>
    %62 = vector.shape_cast %61 : vector<128xi32> to vector<1x128xi32>
    %63 = vector.broadcast %56 : vector<1x128xf32> to vector<8x128xf32>
    %64 = arith.cmpf oeq, %52, %63 : vector<8x128xf32>
    %c8_i32_18 = arith.constant 8 : i32
    %65 = vector.broadcast %c8_i32_18 : i32 to vector<8x128xi32>
    %66 = arith.select %64, %2, %65 : vector<8x128xi1>, vector<8x128xi32>
    %cst_19 = arith.constant dense<2147483647> : vector<128xi32>
    %67 = vector.multi_reduction <minsi>, %66, %cst_19 [0] : vector<8x128xi32> to vector<128xi32>
    %68 = vector.shape_cast %67 : vector<128xi32> to vector<1x128xi32>
    %69 = arith.cmpi eq, %62, %68 : vector<1x128xi32>
    %70 = arith.extui %69 : vector<1x128xi1> to vector<1x128xi32>
    %71 = arith.sitofp %70 : vector<1x128xi32> to vector<1x128xf32>
    %72 = arith.addf %28, %71 : vector<1x128xf32>
    %c1_i32 = arith.constant 1 : i32
    %73 = vector.broadcast %c1_i32 : i32 to vector<6x128xi32>
    %74 = arith.cmpi eq, %3, %73 : vector<6x128xi32>
    %cst_20 = arith.constant 0.000000e+00 : f32
    %75 = vector.shape_cast %71 : vector<1x128xf32> to vector<1x128xf32>
    %76 = vector.broadcast %75 : vector<1x128xf32> to vector<6x128xf32>
    %77 = vector.broadcast %cst_20 : f32 to vector<6x128xf32>
    %78 = arith.select %74, %76, %77 : vector<6x128xi1>, vector<6x128xf32>
    %79 = arith.addf %35, %78 : vector<6x128xf32>
    %80 = vector.broadcast %68 : vector<1x128xi32> to vector<8x128xi32>
    %81 = arith.cmpi eq, %2, %80 : vector<8x128xi32>
    %cst_21 = arith.constant 0.000000e+00 : f32
    %82 = vector.broadcast %cst_21 : f32 to vector<8x128xf32>
    %83 = arith.select %81, %51, %82 : vector<8x128xi1>, vector<8x128xf32>
    %cst_22 = arith.constant dense<0.000000e+00> : vector<128xf32>
    %84 = vector.multi_reduction <add>, %83, %cst_22 [0] : vector<8x128xf32> to vector<128xf32>
    %85 = vector.shape_cast %84 : vector<128xf32> to vector<1x128xf32>
    %86 = vector.broadcast %54 : vector<1x128xf32> to vector<8x128xf32>
    %87 = arith.subf %51, %86 : vector<8x128xf32>
    %88 = math.exp %87 : vector<8x128xf32>
    %cst_23 = arith.constant dense<0.000000e+00> : vector<128xf32>
    %89 = vector.multi_reduction <add>, %88, %cst_23 [0] : vector<8x128xf32> to vector<128xf32>
    %90 = vector.shape_cast %89 : vector<128xf32> to vector<1x128xf32>
    %91 = math.log %90 : vector<1x128xf32>
    %92 = arith.addf %91, %54 : vector<1x128xf32>
    %93 = arith.subf %92, %85 : vector<1x128xf32>
    %94 = arith.addf %50, %93 : vector<1x128xf32>
    %95 = vector.extract_strided_slice %1 {offsets = [16, 0], sizes = [8, 128], strides = [1, 1]} : vector<32x128xf32> to vector<8x128xf32>
    %96 = vector.extract_strided_slice %0 {offsets = [16, 0], sizes = [8, 128], strides = [1, 1]} : vector<32x128xf32> to vector<8x128xf32>
    %cst_24 = arith.constant dense<0xFF800000> : vector<128xf32>
    %97 = vector.multi_reduction <maximumf>, %95, %cst_24 [0] : vector<8x128xf32> to vector<128xf32>
    %98 = vector.shape_cast %97 : vector<128xf32> to vector<1x128xf32>
    %cst_25 = arith.constant dense<0xFF800000> : vector<128xf32>
    %99 = vector.multi_reduction <maximumf>, %96, %cst_25 [0] : vector<8x128xf32> to vector<128xf32>
    %100 = vector.shape_cast %99 : vector<128xf32> to vector<1x128xf32>
    %101 = vector.broadcast %98 : vector<1x128xf32> to vector<8x128xf32>
    %102 = arith.cmpf oeq, %95, %101 : vector<8x128xf32>
    %c8_i32_26 = arith.constant 8 : i32
    %103 = vector.broadcast %c8_i32_26 : i32 to vector<8x128xi32>
    %104 = arith.select %102, %2, %103 : vector<8x128xi1>, vector<8x128xi32>
    %cst_27 = arith.constant dense<2147483647> : vector<128xi32>
    %105 = vector.multi_reduction <minsi>, %104, %cst_27 [0] : vector<8x128xi32> to vector<128xi32>
    %106 = vector.shape_cast %105 : vector<128xi32> to vector<1x128xi32>
    %107 = vector.broadcast %100 : vector<1x128xf32> to vector<8x128xf32>
    %108 = arith.cmpf oeq, %96, %107 : vector<8x128xf32>
    %c8_i32_28 = arith.constant 8 : i32
    %109 = vector.broadcast %c8_i32_28 : i32 to vector<8x128xi32>
    %110 = arith.select %108, %2, %109 : vector<8x128xi1>, vector<8x128xi32>
    %cst_29 = arith.constant dense<2147483647> : vector<128xi32>
    %111 = vector.multi_reduction <minsi>, %110, %cst_29 [0] : vector<8x128xi32> to vector<128xi32>
    %112 = vector.shape_cast %111 : vector<128xi32> to vector<1x128xi32>
    %113 = arith.cmpi eq, %106, %112 : vector<1x128xi32>
    %114 = arith.extui %113 : vector<1x128xi1> to vector<1x128xi32>
    %115 = arith.sitofp %114 : vector<1x128xi32> to vector<1x128xf32>
    %116 = arith.addf %72, %115 : vector<1x128xf32>
    %c2_i32 = arith.constant 2 : i32
    %117 = vector.broadcast %c2_i32 : i32 to vector<6x128xi32>
    %118 = arith.cmpi eq, %3, %117 : vector<6x128xi32>
    %cst_30 = arith.constant 0.000000e+00 : f32
    %119 = vector.shape_cast %115 : vector<1x128xf32> to vector<1x128xf32>
    %120 = vector.broadcast %119 : vector<1x128xf32> to vector<6x128xf32>
    %121 = vector.broadcast %cst_30 : f32 to vector<6x128xf32>
    %122 = arith.select %118, %120, %121 : vector<6x128xi1>, vector<6x128xf32>
    %123 = arith.addf %79, %122 : vector<6x128xf32>
    %124 = vector.broadcast %112 : vector<1x128xi32> to vector<8x128xi32>
    %125 = arith.cmpi eq, %2, %124 : vector<8x128xi32>
    %cst_31 = arith.constant 0.000000e+00 : f32
    %126 = vector.broadcast %cst_31 : f32 to vector<8x128xf32>
    %127 = arith.select %125, %95, %126 : vector<8x128xi1>, vector<8x128xf32>
    %cst_32 = arith.constant dense<0.000000e+00> : vector<128xf32>
    %128 = vector.multi_reduction <add>, %127, %cst_32 [0] : vector<8x128xf32> to vector<128xf32>
    %129 = vector.shape_cast %128 : vector<128xf32> to vector<1x128xf32>
    %130 = vector.broadcast %98 : vector<1x128xf32> to vector<8x128xf32>
    %131 = arith.subf %95, %130 : vector<8x128xf32>
    %132 = math.exp %131 : vector<8x128xf32>
    %cst_33 = arith.constant dense<0.000000e+00> : vector<128xf32>
    %133 = vector.multi_reduction <add>, %132, %cst_33 [0] : vector<8x128xf32> to vector<128xf32>
    %134 = vector.shape_cast %133 : vector<128xf32> to vector<1x128xf32>
    %135 = math.log %134 : vector<1x128xf32>
    %136 = arith.addf %135, %98 : vector<1x128xf32>
    %137 = arith.subf %136, %129 : vector<1x128xf32>
    %138 = arith.addf %94, %137 : vector<1x128xf32>
    %139 = vector.extract_strided_slice %1 {offsets = [24, 0], sizes = [8, 128], strides = [1, 1]} : vector<32x128xf32> to vector<8x128xf32>
    %140 = vector.extract_strided_slice %0 {offsets = [24, 0], sizes = [8, 128], strides = [1, 1]} : vector<32x128xf32> to vector<8x128xf32>
    %cst_34 = arith.constant dense<0xFF800000> : vector<128xf32>
    %141 = vector.multi_reduction <maximumf>, %139, %cst_34 [0] : vector<8x128xf32> to vector<128xf32>
    %142 = vector.shape_cast %141 : vector<128xf32> to vector<1x128xf32>
    %cst_35 = arith.constant dense<0xFF800000> : vector<128xf32>
    %143 = vector.multi_reduction <maximumf>, %140, %cst_35 [0] : vector<8x128xf32> to vector<128xf32>
    %144 = vector.shape_cast %143 : vector<128xf32> to vector<1x128xf32>
    %145 = vector.broadcast %142 : vector<1x128xf32> to vector<8x128xf32>
    %146 = arith.cmpf oeq, %139, %145 : vector<8x128xf32>
    %c8_i32_36 = arith.constant 8 : i32
    %147 = vector.broadcast %c8_i32_36 : i32 to vector<8x128xi32>
    %148 = arith.select %146, %2, %147 : vector<8x128xi1>, vector<8x128xi32>
    %cst_37 = arith.constant dense<2147483647> : vector<128xi32>
    %149 = vector.multi_reduction <minsi>, %148, %cst_37 [0] : vector<8x128xi32> to vector<128xi32>
    %150 = vector.shape_cast %149 : vector<128xi32> to vector<1x128xi32>
    %151 = vector.broadcast %144 : vector<1x128xf32> to vector<8x128xf32>
    %152 = arith.cmpf oeq, %140, %151 : vector<8x128xf32>
    %c8_i32_38 = arith.constant 8 : i32
    %153 = vector.broadcast %c8_i32_38 : i32 to vector<8x128xi32>
    %154 = arith.select %152, %2, %153 : vector<8x128xi1>, vector<8x128xi32>
    %cst_39 = arith.constant dense<2147483647> : vector<128xi32>
    %155 = vector.multi_reduction <minsi>, %154, %cst_39 [0] : vector<8x128xi32> to vector<128xi32>
    %156 = vector.shape_cast %155 : vector<128xi32> to vector<1x128xi32>
    %157 = arith.cmpi eq, %150, %156 : vector<1x128xi32>
    %158 = arith.extui %157 : vector<1x128xi1> to vector<1x128xi32>
    %159 = arith.sitofp %158 : vector<1x128xi32> to vector<1x128xf32>
    %160 = arith.addf %116, %159 : vector<1x128xf32>
    %c3_i32 = arith.constant 3 : i32
    %161 = vector.broadcast %c3_i32 : i32 to vector<6x128xi32>
    %162 = arith.cmpi eq, %3, %161 : vector<6x128xi32>
    %cst_40 = arith.constant 0.000000e+00 : f32
    %163 = vector.shape_cast %159 : vector<1x128xf32> to vector<1x128xf32>
    %164 = vector.broadcast %163 : vector<1x128xf32> to vector<6x128xf32>
    %165 = vector.broadcast %cst_40 : f32 to vector<6x128xf32>
    %166 = arith.select %162, %164, %165 : vector<6x128xi1>, vector<6x128xf32>
    %167 = arith.addf %123, %166 : vector<6x128xf32>
    %168 = vector.broadcast %156 : vector<1x128xi32> to vector<8x128xi32>
    %169 = arith.cmpi eq, %2, %168 : vector<8x128xi32>
    %cst_41 = arith.constant 0.000000e+00 : f32
    %170 = vector.broadcast %cst_41 : f32 to vector<8x128xf32>
    %171 = arith.select %169, %139, %170 : vector<8x128xi1>, vector<8x128xf32>
    %cst_42 = arith.constant dense<0.000000e+00> : vector<128xf32>
    %172 = vector.multi_reduction <add>, %171, %cst_42 [0] : vector<8x128xf32> to vector<128xf32>
    %173 = vector.shape_cast %172 : vector<128xf32> to vector<1x128xf32>
    %174 = vector.broadcast %142 : vector<1x128xf32> to vector<8x128xf32>
    %175 = arith.subf %139, %174 : vector<8x128xf32>
    %176 = math.exp %175 : vector<8x128xf32>
    %cst_43 = arith.constant dense<0.000000e+00> : vector<128xf32>
    %177 = vector.multi_reduction <add>, %176, %cst_43 [0] : vector<8x128xf32> to vector<128xf32>
    %178 = vector.shape_cast %177 : vector<128xf32> to vector<1x128xf32>
    %179 = math.log %178 : vector<1x128xf32>
    %180 = arith.addf %179, %142 : vector<1x128xf32>
    %181 = arith.subf %180, %173 : vector<1x128xf32>
    %182 = arith.addf %138, %181 : vector<1x128xf32>
    %cst_44 = arith.constant 2.500000e-01 : f32
    %183 = vector.broadcast %cst_44 : f32 to vector<1x128xf32>
    %184 = arith.mulf %182, %183 : vector<1x128xf32>
    %cst_45 = arith.constant 4.000000e+00 : f32
    %185 = vector.broadcast %cst_45 : f32 to vector<1x128xf32>
    %186 = arith.cmpf oeq, %160, %185 : vector<1x128xf32>
    %187 = arith.extui %186 : vector<1x128xi1> to vector<1x128xi32>
    %188 = arith.sitofp %187 : vector<1x128xi32> to vector<1x128xf32>
    %c4_i32 = arith.constant 4 : i32
    %189 = vector.broadcast %c4_i32 : i32 to vector<6x128xi32>
    %190 = arith.cmpi eq, %3, %189 : vector<6x128xi32>
    %cst_46 = arith.constant 0.000000e+00 : f32
    %191 = vector.shape_cast %184 : vector<1x128xf32> to vector<1x128xf32>
    %192 = vector.broadcast %191 : vector<1x128xf32> to vector<6x128xf32>
    %193 = vector.broadcast %cst_46 : f32 to vector<6x128xf32>
    %194 = arith.select %190, %192, %193 : vector<6x128xi1>, vector<6x128xf32>
    %195 = arith.addf %167, %194 : vector<6x128xf32>
    %c5_i32 = arith.constant 5 : i32
    %196 = vector.broadcast %c5_i32 : i32 to vector<6x128xi32>
    %197 = arith.cmpi eq, %3, %196 : vector<6x128xi32>
    %cst_47 = arith.constant 0.000000e+00 : f32
    %198 = vector.shape_cast %188 : vector<1x128xf32> to vector<1x128xf32>
    %199 = vector.broadcast %198 : vector<1x128xf32> to vector<6x128xf32>
    %200 = vector.broadcast %cst_47 : f32 to vector<6x128xf32>
    %201 = arith.select %197, %199, %200 : vector<6x128xi1>, vector<6x128xf32>
    %202 = arith.addf %195, %201 : vector<6x128xf32>
    %c0_48 = arith.constant 0 : index
    %c0_49 = arith.constant 0 : index
    %203 = vector.load %arg3[%c0_48, %c0_49] : memref<6x128xf32, #tpu.memory_space<vmem>>, vector<6x128xf32>
    tpu.vector_store %arg3[%c0_48, %c0_49], %202 {strides = array<i32>} : memref<6x128xf32, #tpu.memory_space<vmem>>, vector<6x128xf32>,
    return
  }
  func.func @transform_0(%arg0: i32) -> (i32, i32) {
    %c0_i32 = arith.constant 0 : i32
    %c0_i32_0 = arith.constant 0 : i32
    return %c0_i32, %arg0 : i32, i32
  }
  func.func @transform_1(%arg0: i32) -> (i32, i32) {
    %c0_i32 = arith.constant 0 : i32
    %c0_i32_0 = arith.constant 0 : i32
    return %c0_i32, %arg0 : i32, i32
  }
  func.func @transform_2(%arg0: i32) -> (i32, i32) {
    %c0_i32 = arith.constant 0 : i32
    %c0_i32_0 = arith.constant 0 : i32
    return %c0_i32, %arg0 : i32, i32
  }
}

</mosaic_0001>

<llo_original>
// kernel: diff_loss.1
$region0: #{diff_loss.1}
  #allocation0 [shape = 'u32[]', space=smem, size = 0x4, offset = 0x4, fixed_abs, tag = 'smem constant byte address 0x4 - core index']
  #allocation1 [shape = 'u32[144,128]{1,0:T(1,128)}', space=vmem, size = 0x12000, scoped, tag = 'internal scratch']
  %s0 = inlined_call_operand.vmem [shape: f32[32,128], index: 0, kind: input, shape index: {}]
  %s1 = inlined_call_operand.vmem [shape: f32[32,128], index: 1, kind: input, shape index: {}]
  %s2 = inlined_call_operand.vmem [shape: f32[6,128], index: 2, kind: output, shape index: {}]
  %s3 = sld [smem:[#allocation0]]
  $region18: #{diff_loss.1} parent=0
    _
  %s5 = ssub.s32 1, %s3
  %s6 = scalar_select 0, %s5, %s3
  // Predicated region
  $region2: #{diff_loss.1} parent=0 // pred_check
    _
  $region3: #{diff_loss.1} parent=0 // pred_check_branch
    %8 = sbr.rel (0) target = $region5
  $region4: #{diff_loss.1} parent=0 // pred_region
    _
  $region5: #{diff_loss.1} parent=0 // pred_fallthru
    _
  // Predicated region
  $region6: #{diff_loss.1} parent=0 // pred_check
    _
  $region7: #{diff_loss.1} parent=0 // pred_check_branch
    %10 = sbr.rel (0) target = $region9
  $region8: #{diff_loss.1} parent=0 // pred_region
    _
  $region9: #{diff_loss.1} parent=0 // pred_fallthru
    _
  %v11 = vld [vmem:[%s0] sm:$0xff]
  %v12 = vld [vmem:[%s0 + $0x8] sm:$0xff]
  %v13 = vld [vmem:[%s0 + $0x10] sm:$0xff]
  %v14 = vld [vmem:[%s0 + $0x18] sm:$0xff]
  %v15 = vld [vmem:[%s1] sm:$0xff]
  %v16 = vld [vmem:[%s1 + $0x8] sm:$0xff]
  %v17 = vld [vmem:[%s1 + $0x10] sm:$0xff]
  %v18 = vld [vmem:[%s1 + $0x18] sm:$0xff]
  %v19 = vlaneseq
  %v20 = vshrl.u32 %v19, 7
  %v21 = vrot.slane %v15, 4
  %v22 = vmax.f32 %v15, %v21
  %v23 = vrot.slane %v22, 2
  %v24 = vmax.f32 %v22, %v23
  %v25 = vrot.slane %v24, 1
  %v26 = vmax.f32 %v24, %v25
  %v27 = vrot.slane %v11, 4
  %v28 = vmax.f32 %v11, %v27
  %v29 = vrot.slane %v28, 2
  %v30 = vmax.f32 %v28, %v29
  %v31 = vrot.slane %v30, 1
  %v32 = vmax.f32 %v30, %v31
  %vm33 = vcmp.eq.f32.partialorder %v15, %v26
  %v34 = vsel %vm33, %v20, 8
  %v35 = vrot.slane %v34, 4
  %vm36 = vcmp.lt.s32.totalorder %v34, %v35
  %v37 = vsel %vm36, %v34, %v35
  %v38 = vrot.slane %v37, 2
  %vm39 = vcmp.lt.s32.totalorder %v37, %v38
  %v40 = vsel %vm39, %v37, %v38
  %v41 = vrot.slane %v40, 1
  %vm42 = vcmp.lt.s32.totalorder %v40, %v41
  %v43 = vsel %vm42, %v40, %v41
  %vm44 = vcmp.eq.f32.partialorder %v11, %v32
  %v45 = vsel %vm44, %v20, 8
  %v46 = vrot.slane %v45, 4
  %vm47 = vcmp.lt.s32.totalorder %v45, %v46
  %v48 = vsel %vm47, %v45, %v46
  %v49 = vrot.slane %v48, 2
  %vm50 = vcmp.lt.s32.totalorder %v48, %v49
  %v51 = vsel %vm50, %v48, %v49
  %v52 = vrot.slane %v51, 1
  %vm53 = vcmp.lt.s32.totalorder %v51, %v52
  %v54 = vsel %vm53, %v51, %v52
  %vm55 = vcmp.eq.s32.totalorder %v43, %v54
  %v56 = vsel %vm55, 1, 0
  %v57 = vcvt.s32.f32 %v56
  %v58 = vadd.f32 %v57, 0.0
  %vm59 = vcmp.eq.s32.totalorder %v20, 0
  %v60 = vsel %vm59, %v57, 0.0
  %v61 = vadd.f32 %v60, 0.0
  %vm62 = vcmp.eq.s32.totalorder %v20, %v54
  %v63 = vsel %vm62, %v15, 0.0
  %v64 = vrot.slane %v63, 4
  %v65 = vadd.f32 %v63, %v64
  %v66 = vrot.slane %v65, 2
  %v67 = vadd.f32 %v65, %v66
  %v68 = vrot.slane %v67, 1
  %v69 = vadd.f32 %v67, %v68
  %v70 = vsub.f32 %v15, %v26
  %v71 = vmul.f32 %v70, 1.442695
  %v72 = vpow.pop %v71
  %v73 = vrot.slane %v72, 4
  %v74 = vadd.f32 %v72, %v73
  %v75 = vrot.slane %v74, 2
  %v76 = vadd.f32 %v74, %v75
  %v77 = vrot.slane %v76, 1
  %v78 = vadd.f32 %v76, %v77
  %v79 = vlog2.pop %v78
  %v80 = vmul.f32 %v79, 0.6931472
  %v81 = vadd.f32 %v80, %v26
  %v82 = vsub.f32 %v81, %v69
  %v83 = vadd.f32 %v82, 0.0
  %v84 = vrot.slane %v16, 4
  %v85 = vmax.f32 %v16, %v84
  %v86 = vrot.slane %v85, 2
  %v87 = vmax.f32 %v85, %v86
  %v88 = vrot.slane %v87, 1
  %v89 = vmax.f32 %v87, %v88
  %v90 = vrot.slane %v12, 4
  %v91 = vmax.f32 %v12, %v90
  %v92 = vrot.slane %v91, 2
  %v93 = vmax.f32 %v91, %v92
  %v94 = vrot.slane %v93, 1
  %v95 = vmax.f32 %v93, %v94
  %vm96 = vcmp.eq.f32.partialorder %v16, %v89
  %v97 = vsel %vm96, %v20, 8
  %v98 = vrot.slane %v97, 4
  %vm99 = vcmp.lt.s32.totalorder %v97, %v98
  %v100 = vsel %vm99, %v97, %v98
  %v101 = vrot.slane %v100, 2
  %vm102 = vcmp.lt.s32.totalorder %v100, %v101
  %v103 = vsel %vm102, %v100, %v101
  %v104 = vrot.slane %v103, 1
  %vm105 = vcmp.lt.s32.totalorder %v103, %v104
  %v106 = vsel %vm105, %v103, %v104
  %vm107 = vcmp.eq.f32.partialorder %v12, %v95
  %v108 = vsel %vm107, %v20, 8
  %v109 = vrot.slane %v108, 4
  %vm110 = vcmp.lt.s32.totalorder %v108, %v109
  %v111 = vsel %vm110, %v108, %v109
  %v112 = vrot.slane %v111, 2
  %vm113 = vcmp.lt.s32.totalorder %v111, %v112
  %v114 = vsel %vm113, %v111, %v112
  %v115 = vrot.slane %v114, 1
  %vm116 = vcmp.lt.s32.totalorder %v114, %v115
  %v117 = vsel %vm116, %v114, %v115
  %vm118 = vcmp.eq.s32.totalorder %v106, %v117
  %v119 = vsel %vm118, 1, 0
  %v120 = vcvt.s32.f32 %v119
  %v121 = vadd.f32 %v58, %v120
  %vm122 = vcmp.eq.s32.totalorder %v20, 1
  %v123 = vsel %vm122, %v120, 0.0
  %v124 = vadd.f32 %v61, %v123
  %vm125 = vcmp.eq.s32.totalorder %v20, %v117
  %v126 = vsel %vm125, %v16, 0.0
  %v127 = vrot.slane %v126, 4
  %v128 = vadd.f32 %v126, %v127
  %v129 = vrot.slane %v128, 2
  %v130 = vadd.f32 %v128, %v129
  %v131 = vrot.slane %v130, 1
  %v132 = vadd.f32 %v130, %v131
  %v133 = vsub.f32 %v16, %v89
  %v134 = vmul.f32 %v133, 1.442695
  %v135 = vpow.pop %v134
  %v136 = vrot.slane %v135, 4
  %v137 = vadd.f32 %v135, %v136
  %v138 = vrot.slane %v137, 2
  %v139 = vadd.f32 %v137, %v138
  %v140 = vrot.slane %v139, 1
  %v141 = vadd.f32 %v139, %v140
  %v142 = vlog2.pop %v141
  %v143 = vmul.f32 %v142, 0.6931472
  %v144 = vadd.f32 %v143, %v89
  %v145 = vsub.f32 %v144, %v132
  %v146 = vadd.f32 %v83, %v145
  %v147 = vrot.slane %v17, 4
  %v148 = vmax.f32 %v17, %v147
  %v149 = vrot.slane %v148, 2
  %v150 = vmax.f32 %v148, %v149
  %v151 = vrot.slane %v150, 1
  %v152 = vmax.f32 %v150, %v151
  %v153 = vrot.slane %v13, 4
  %v154 = vmax.f32 %v13, %v153
  %v155 = vrot.slane %v154, 2
  %v156 = vmax.f32 %v154, %v155
  %v157 = vrot.slane %v156, 1
  %v158 = vmax.f32 %v156, %v157
  %vm159 = vcmp.eq.f32.partialorder %v17, %v152
  %v160 = vsel %vm159, %v20, 8
  %v161 = vrot.slane %v160, 4
  %vm162 = vcmp.lt.s32.totalorder %v160, %v161
  %v163 = vsel %vm162, %v160, %v161
  %v164 = vrot.slane %v163, 2
  %vm165 = vcmp.lt.s32.totalorder %v163, %v164
  %v166 = vsel %vm165, %v163, %v164
  %v167 = vrot.slane %v166, 1
  %vm168 = vcmp.lt.s32.totalorder %v166, %v167
  %v169 = vsel %vm168, %v166, %v167
  %vm170 = vcmp.eq.f32.partialorder %v13, %v158
  %v171 = vsel %vm170, %v20, 8
  %v172 = vrot.slane %v171, 4
  %vm173 = vcmp.lt.s32.totalorder %v171, %v172
  %v174 = vsel %vm173, %v171, %v172
  %v175 = vrot.slane %v174, 2
  %vm176 = vcmp.lt.s32.totalorder %v174, %v175
  %v177 = vsel %vm176, %v174, %v175
  %v178 = vrot.slane %v177, 1
  %vm179 = vcmp.lt.s32.totalorder %v177, %v178
  %v180 = vsel %vm179, %v177, %v178
  %vm181 = vcmp.eq.s32.totalorder %v169, %v180
  %v182 = vsel %vm181, 1, 0
  %v183 = vcvt.s32.f32 %v182
  %v184 = vadd.f32 %v121, %v183
  %vm185 = vcmp.eq.s32.totalorder %v20, 2
  %v186 = vsel %vm185, %v183, 0.0
  %v187 = vadd.f32 %v124, %v186
  %vm188 = vcmp.eq.s32.totalorder %v20, %v180
  %v189 = vsel %vm188, %v17, 0.0
  %v190 = vrot.slane %v189, 4
  %v191 = vadd.f32 %v189, %v190
  %v192 = vrot.slane %v191, 2
  %v193 = vadd.f32 %v191, %v192
  %v194 = vrot.slane %v193, 1
  %v195 = vadd.f32 %v193, %v194
  %v196 = vsub.f32 %v17, %v152
  %v197 = vmul.f32 %v196, 1.442695
  %v198 = vpow.pop %v197
  %v199 = vrot.slane %v198, 4
  %v200 = vadd.f32 %v198, %v199
  %v201 = vrot.slane %v200, 2
  %v202 = vadd.f32 %v200, %v201
  %v203 = vrot.slane %v202, 1
  %v204 = vadd.f32 %v202, %v203
  %v205 = vlog2.pop %v204
  %v206 = vmul.f32 %v205, 0.6931472
  %v207 = vadd.f32 %v206, %v152
  %v208 = vsub.f32 %v207, %v195
  %v209 = vadd.f32 %v146, %v208
  %v210 = vrot.slane %v18, 4
  %v211 = vmax.f32 %v18, %v210
  %v212 = vrot.slane %v211, 2
  %v213 = vmax.f32 %v211, %v212
  %v214 = vrot.slane %v213, 1
  %v215 = vmax.f32 %v213, %v214
  %v216 = vrot.slane %v14, 4
  %v217 = vmax.f32 %v14, %v216
  %v218 = vrot.slane %v217, 2
  %v219 = vmax.f32 %v217, %v218
  %v220 = vrot.slane %v219, 1
  %v221 = vmax.f32 %v219, %v220
  %vm222 = vcmp.eq.f32.partialorder %v18, %v215
  %v223 = vsel %vm222, %v20, 8
  %v224 = vrot.slane %v223, 4
  %vm225 = vcmp.lt.s32.totalorder %v223, %v224
  %v226 = vsel %vm225, %v223, %v224
  %v227 = vrot.slane %v226, 2
  %vm228 = vcmp.lt.s32.totalorder %v226, %v227
  %v229 = vsel %vm228, %v226, %v227
  %v230 = vrot.slane %v229, 1
  %vm231 = vcmp.lt.s32.totalorder %v229, %v230
  %v232 = vsel %vm231, %v229, %v230
  %vm233 = vcmp.eq.f32.partialorder %v14, %v221
  %v234 = vsel %vm233, %v20, 8
  %v235 = vrot.slane %v234, 4
  %vm236 = vcmp.lt.s32.totalorder %v234, %v235
  %v237 = vsel %vm236, %v234, %v235
  %v238 = vrot.slane %v237, 2
  %vm239 = vcmp.lt.s32.totalorder %v237, %v238
  %v240 = vsel %vm239, %v237, %v238
  %v241 = vrot.slane %v240, 1
  %vm242 = vcmp.lt.s32.totalorder %v240, %v241
  %v243 = vsel %vm242, %v240, %v241
  %vm244 = vcmp.eq.s32.totalorder %v232, %v243
  %v245 = vsel %vm244, 1, 0
  %v246 = vcvt.s32.f32 %v245
  %v247 = vadd.f32 %v184, %v246
  %vm248 = vcmp.eq.s32.totalorder %v20, 3
  %v249 = vsel %vm248, %v246, 0.0
  %v250 = vadd.f32 %v187, %v249
  %vm251 = vcmp.eq.s32.totalorder %v20, %v243
  %v252 = vsel %vm251, %v18, 0.0
  %v253 = vrot.slane %v252, 4
  %v254 = vadd.f32 %v252, %v253
  %v255 = vrot.slane %v254, 2
  %v256 = vadd.f32 %v254, %v255
  %v257 = vrot.slane %v256, 1
  %v258 = vadd.f32 %v256, %v257
  %v259 = vsub.f32 %v18, %v215
  %v260 = vmul.f32 %v259, 1.442695
  %v261 = vpow.pop %v260
  %v262 = vrot.slane %v261, 4
  %v263 = vadd.f32 %v261, %v262
  %v264 = vrot.slane %v263, 2
  %v265 = vadd.f32 %v263, %v264
  %v266 = vrot.slane %v265, 1
  %v267 = vadd.f32 %v265, %v266
  %v268 = vlog2.pop %v267
  %v269 = vmul.f32 %v268, 0.6931472
  %v270 = vadd.f32 %v269, %v215
  %v271 = vsub.f32 %v270, %v258
  %v272 = vadd.f32 %v209, %v271
  %v273 = vmul.f32 %v272, 0.25
  %vm274 = vcmp.eq.f32.partialorder %v247, 4.0
  %v275 = vsel %vm274, 1, 0
  %v276 = vcvt.s32.f32 %v275
  %vm277 = vcmp.eq.s32.totalorder %v20, 4
  %v278 = vsel %vm277, %v273, 0.0
  %v279 = vadd.f32 %v250, %v278
  %vm280 = vcmp.eq.s32.totalorder %v20, 5
  %v281 = vsel %vm280, %v276, 0.0
  %v282 = vadd.f32 %v279, %v281
  %283 = vst [vmem:[%s2] sm:$0x3f] %v282
  // Predicated region
  $region10: #{diff_loss.1} parent=0 // pred_check
    _
  $region11: #{diff_loss.1} parent=0 // pred_check_branch
    %285 = sbr.rel (0) target = $region13
  $region12: #{diff_loss.1} parent=0 // pred_region
    _
  $region13: #{diff_loss.1} parent=0 // pred_fallthru
    _
  // Predicated region
  $region14: #{diff_loss.1} parent=0 // pred_check
    _
  $region15: #{diff_loss.1} parent=0 // pred_check_branch
    %287 = sbr.rel (0) target = $region17
  $region16: #{diff_loss.1} parent=0 // pred_region
    _
  $region17: #{diff_loss.1} parent=0 // pred_fallthru
    _

</llo_original>
